<compile_context>
chip_gen: v5e
topology: v5e:2x2
jax: 0.10.0
libtpu: 0.0.40
codegen_flags: <defaults>
</compile_context>

<pallas_src>
from functools import partial

import numpy as np
import jax
import jax.numpy as jnp
from jax import lax
from jax.experimental import pallas as pl
from jax.experimental.pallas import tpu as pltpu

EPS = 1e-5


def _downsample_kernel(xt_ref, mmat_ref, rows_ref, cavg_ref, ravg_ref,
                       rbt_ref, crep_ref, sw_ref, o_ref, *, hw):
    # ---- conv (1x3, stride (1,2), pad (0,1)) as one MXU matmul --------------
    y = jnp.dot(xt_ref[...], mmat_ref[...], preferred_element_type=jnp.float32)
    y = y + rows_ref[0:1, :]                      # conv bias (lane-dense row)

    # ---- SwitchNorm2d statistics (training-mode mean_bn / var_bn) ----------
    # Lane reduction over Wout per channel via MXU, then sublane reduction
    # over H per batch via MXU: (NH, CWo) @ (CWo, C) -> (NH, C);
    # (N, NH) @ (NH, C) -> (N, C).  All selector matrices are precomputed.
    s1 = jnp.dot(y, cavg_ref[...], preferred_element_type=jnp.float32)       # (NH, C)
    s2 = jnp.dot(y * y, cavg_ref[...], preferred_element_type=jnp.float32)   # (NH, C)
    mean_in = jnp.dot(ravg_ref[...], s1, preferred_element_type=jnp.float32)  # (N, C)
    msq_in = jnp.dot(ravg_ref[...], s2, preferred_element_type=jnp.float32)   # (N, C)
    var_in = (msq_in - mean_in * mean_in) * (hw / (hw - 1.0))  # torch unbiased

    temp = var_in + mean_in * mean_in
    mean_ln = jnp.mean(mean_in, axis=1, keepdims=True)                # (N, 1)
    var_ln = jnp.mean(temp, axis=1, keepdims=True) - mean_ln * mean_ln
    mean_bn = jnp.mean(mean_in, axis=0, keepdims=True)                # (1, C)
    var_bn = jnp.mean(temp, axis=0, keepdims=True) - mean_bn * mean_bn

    mw0, mw1, mw2 = sw_ref[0], sw_ref[1], sw_ref[2]
    vw0, vw1, vw2 = sw_ref[3], sw_ref[4], sw_ref[5]
    mean = mw0 * mean_in + mw1 * mean_ln + mw2 * mean_bn              # (N, C)
    var = vw0 * var_in + vw1 * var_ln + vw2 * var_bn                  # (N, C)
    inv_std = lax.rsqrt(var + EPS)

    # Broadcast (N, C) stats back to the (N*H, C*Wout) layout via matmuls
    # (MXU-side outer products instead of XLU copies).
    mean_full = jnp.dot(
        rbt_ref[...],
        jnp.dot(mean, crep_ref[...], preferred_element_type=jnp.float32),
        preferred_element_type=jnp.float32)
    istd_full = jnp.dot(
        rbt_ref[...],
        jnp.dot(inv_std, crep_ref[...], preferred_element_type=jnp.float32),
        preferred_element_type=jnp.float32)

    z = (y - mean_full) * istd_full
    z = z * rows_ref[1:2, :] + rows_ref[2:3, :]   # SwitchNorm affine (gamma, beta)

    # ---- PReLU (per-channel alpha, lane-repeated) ---------------------------
    o_ref[...] = jnp.where(z >= 0.0, z, z * rows_ref[3:4, :]).astype(o_ref.dtype)


def downsample_layer_pallas(x, conv_w, conv_b, sn_gamma, sn_beta,
                            sn_mean_w, sn_var_w, prelu_alpha):
    N, C, H, W = x.shape
    Wout = (W + 2 - 3) // 2 + 1
    CW, CWo, NH = C * W, C * Wout, N * H

    # LHS patches: (N*H, C*W) -- pure layout plumbing in the wrapper.
    xt = jnp.transpose(x, (0, 2, 1, 3)).reshape(NH, CW).astype(jnp.float32)

    # Band matrix folding taps + stride-2 + zero padding of the 1x3 conv.
    sel = np.zeros((3, W, Wout), np.float32)
    for kw in range(3):
        for wo in range(Wout):
            w_in = 2 * wo - 1 + kw
            if 0 <= w_in < W:
                sel[kw, w_in, wo] = 1.0
    mmat = jnp.einsum('cdk,kwo->dwco',
                      conv_w[:, :, 0, :].astype(jnp.float32),
                      jnp.asarray(sel)).reshape(CW, CWo)

    # Lane-dense per-channel parameter rows: [conv bias, gamma, beta, alpha].
    rows = jnp.stack([
        jnp.repeat(conv_b.astype(jnp.float32).reshape(C), Wout),
        jnp.repeat(sn_gamma.astype(jnp.float32).reshape(C), Wout),
        jnp.repeat(sn_beta.astype(jnp.float32).reshape(C), Wout),
        jnp.repeat(prelu_alpha.astype(jnp.float32).reshape(C), Wout),
    ], axis=0)                                                     # (4, C*Wout)

    # Selector matrices for the norm statistics / broadcasts (MXU-side).
    cavg = jnp.asarray(np.kron(np.eye(C), np.ones((Wout, 1))) / Wout, jnp.float32)  # (CWo, C)
    ravg = jnp.asarray(np.kron(np.eye(N), np.ones((1, H))) / H, jnp.float32)        # (N, NH)
    rbt = jnp.asarray(np.kron(np.eye(N), np.ones((H, 1))), jnp.float32)             # (NH, N)
    crep = jnp.asarray(np.kron(np.eye(C), np.ones((1, Wout))), jnp.float32)         # (C, CWo)

    # Softmax-ed switch weights -> 6 scalars in SMEM.
    sw = jnp.concatenate([jax.nn.softmax(sn_mean_w.astype(jnp.float32)),
                          jax.nn.softmax(sn_var_w.astype(jnp.float32))])   # (6,)

    kernel = partial(_downsample_kernel, hw=float(H * Wout))
    out2d = pl.pallas_call(
        kernel,
        out_shape=jax.ShapeDtypeStruct((NH, CWo), x.dtype),
        grid=(1,),
        in_specs=[
            pl.BlockSpec((NH, CW), lambda i: (0, 0)),
            pl.BlockSpec((CW, CWo), lambda i: (0, 0)),
            pl.BlockSpec((4, CWo), lambda i: (0, 0)),
            pl.BlockSpec((CWo, C), lambda i: (0, 0)),
            pl.BlockSpec((N, NH), lambda i: (0, 0)),
            pl.BlockSpec((NH, N), lambda i: (0, 0)),
            pl.BlockSpec((C, CWo), lambda i: (0, 0)),
            pl.BlockSpec(memory_space=pltpu.MemorySpace.SMEM),
        ],
        out_specs=pl.BlockSpec((NH, CWo), lambda i: (0, 0)),
        compiler_params=pltpu.CompilerParams(
            dimension_semantics=("arbitrary",)),
    )(xt, mmat, rows, cavg, ravg, rbt, crep, sw)

    # Back to PyTorch NCHW: (N*H, C*Wout) -> (N, C, H, Wout).
    return out2d.reshape(N, H, C, Wout).transpose(0, 2, 1, 3)


def downsample_layer_reference(x, conv_w, conv_b, sn_gamma, sn_beta,
                               sn_mean_w, sn_var_w, prelu_alpha, eps=EPS):
    """float64 numpy reference mirroring the PyTorch forward (training mode)."""
    x = np.asarray(x, np.float64)
    conv_w = np.asarray(conv_w, np.float64)
    conv_b = np.asarray(conv_b, np.float64)
    N, C, H, W = x.shape
    Wout = (W + 2 - 3) // 2 + 1
    xp = np.pad(x, ((0, 0), (0, 0), (0, 0), (1, 1)))
    y = np.zeros((N, C, H, Wout), np.float64)
    for co in range(C):
        acc = np.zeros((N, H, Wout), np.float64)
        for ci in range(C):
            for kw in range(3):
                acc += conv_w[co, ci, 0, kw] * xp[:, ci, :, kw:kw + 2 * Wout:2]
        y[:, co] = acc + conv_b[co]

    yv = y.reshape(N, C, -1)
    mean_in = yv.mean(-1, keepdims=True)
    var_in = yv.var(-1, keepdims=True, ddof=1)       # torch default unbiased
    mean_ln = mean_in.mean(1, keepdims=True)
    temp = var_in + mean_in ** 2
    var_ln = temp.mean(1, keepdims=True) - mean_ln ** 2
    mean_bn = mean_in.mean(0, keepdims=True)
    var_bn = temp.mean(0, keepdims=True) - mean_bn ** 2

    def softmax(v):
        e = np.exp(np.asarray(v, np.float64) - np.max(v))
        return e / e.sum()

    mw = softmax(sn_mean_w)
    vw = softmax(sn_var_w)
    mean = mw[0] * mean_in + mw[1] * mean_ln + mw[2] * mean_bn
    var = vw[0] * var_in + vw[1] * var_ln + vw[2] * var_bn
    z = (yv - mean) / np.sqrt(var + eps)
    z = z.reshape(N, C, H, Wout)
    z = z * np.asarray(sn_gamma, np.float64).reshape(1, C, 1, 1) \
        + np.asarray(sn_beta, np.float64).reshape(1, C, 1, 1)
    a = np.asarray(prelu_alpha, np.float64).reshape(1, C, 1, 1)
    return np.where(z >= 0, z, a * z)


if __name__ == "__main__":
    key = jax.random.PRNGKey(0)
    ks = jax.random.split(key, 7)
    N, C, H, W = 2, 4, 16, 16

    x = jax.random.normal(ks[0], (N, C, H, W), jnp.float32)
    bound = 1.0 / np.sqrt(C * 1 * 3)
    conv_w = jax.random.uniform(ks[1], (C, C, 1, 3), jnp.float32, -bound, bound)
    conv_b = jax.random.uniform(ks[2], (C,), jnp.float32, -bound, bound)
    sn_gamma = 1.0 + 0.1 * jax.random.normal(ks[3], (C,), jnp.float32)
    sn_beta = 0.1 * jax.random.normal(ks[4], (C,), jnp.float32)
    sn_mean_w = jax.random.normal(ks[5], (3,), jnp.float32)
    sn_var_w = jax.random.normal(ks[6], (3,), jnp.float32)
    prelu_alpha = jnp.full((C,), 0.25, jnp.float32)   # nn.PReLU default init

    y = downsample_layer_pallas(x, conv_w, conv_b, sn_gamma, sn_beta,
                                sn_mean_w, sn_var_w, prelu_alpha)
    y = jax.block_until_ready(y)

    ref = downsample_layer_reference(x, conv_w, conv_b, sn_gamma, sn_beta,
                                     sn_mean_w, sn_var_w, prelu_alpha)
    np.testing.assert_allclose(np.asarray(y), ref.astype(np.float32),
                               atol=2e-3, rtol=2e-3)
    assert y.shape == (N, C, H, (W + 2 - 3) // 2 + 1)
    print("KERNEL_OK")
</pallas_src>

<mosaic_0001>
module attributes {stable_mosaic.version = 11 : i64} {
  func.func @_downsample_kernel(%arg0: i32, %arg1: memref<32x64xf32, #tpu.memory_space<vmem>>, %arg2: memref<64x32xf32, #tpu.memory_space<vmem>>, %arg3: memref<4x32xf32, #tpu.memory_space<vmem>>, %arg4: memref<32x4xf32, #tpu.memory_space<vmem>>, %arg5: memref<2x32xf32, #tpu.memory_space<vmem>>, %arg6: memref<32x2xf32, #tpu.memory_space<vmem>>, %arg7: memref<4x32xf32, #tpu.memory_space<vmem>>, %arg8: memref<6xf32, #tpu.memory_space<smem>>, %arg9: memref<32x32xf32, #tpu.memory_space<vmem>>) attributes {dimension_semantics = [#tpu.dimension_semantics<arbitrary>], iteration_bounds = array<i64: 1>, scalar_prefetch = 0 : i64, scratch_operands = 0 : i64, tpu.core_type = #tpu.core_type<tc>, window_params = [{pipeline_mode = #tpu.pipeline_mode<synchronous>, transform_indices = @transform_0, window_bounds = array<i64: 32, 64>}, {pipeline_mode = #tpu.pipeline_mode<synchronous>, transform_indices = @transform_1, window_bounds = array<i64: 64, 32>}, {pipeline_mode = #tpu.pipeline_mode<synchronous>, transform_indices = @transform_2, window_bounds = array<i64: 4, 32>}, {pipeline_mode = #tpu.pipeline_mode<synchronous>, transform_indices = @transform_3, window_bounds = array<i64: 32, 4>}, {pipeline_mode = #tpu.pipeline_mode<synchronous>, transform_indices = @transform_4, window_bounds = array<i64: 2, 32>}, {pipeline_mode = #tpu.pipeline_mode<synchronous>, transform_indices = @transform_5, window_bounds = array<i64: 32, 2>}, {pipeline_mode = #tpu.pipeline_mode<synchronous>, transform_indices = @transform_6, window_bounds = array<i64: 4, 32>}, {transform_indices = @transform_7, window_bounds = array<i64: 6>}, {pipeline_mode = #tpu.pipeline_mode<synchronous>, transform_indices = @transform_8, window_bounds = array<i64: 32, 32>}]} {
    %c0 = arith.constant 0 : index
    %c0_0 = arith.constant 0 : index
    %0 = vector.load %arg1[%c0, %c0_0] : memref<32x64xf32, #tpu.memory_space<vmem>>, vector<32x64xf32>
    %c0_1 = arith.constant 0 : index
    %c0_2 = arith.constant 0 : index
    %1 = vector.load %arg2[%c0_1, %c0_2] : memref<64x32xf32, #tpu.memory_space<vmem>>, vector<64x32xf32>
    %cst = arith.constant dense<0.000000e+00> : vector<32x32xf32>
    %2 = tpu.matmul %0, %1, %cst {dimension_numbers = #tpu.dot_dimension_numbers<[1], [0], [0], [1], [0, 0, 1, 1], [], []>} : vector<32x64xf32>, vector<64x32xf32>, vector<32x32xf32> -> vector<32x32xf32>
    %c0_3 = arith.constant 0 : index
    %c0_4 = arith.constant 0 : index
    %3 = vector.load %arg3[%c0_3, %c0_4] : memref<4x32xf32, #tpu.memory_space<vmem>>, vector<1x32xf32>
    %4 = vector.broadcast %3 : vector<1x32xf32> to vector<32x32xf32>
    %5 = arith.addf %2, %4 : vector<32x32xf32>
    %c0_5 = arith.constant 0 : index
    %c0_6 = arith.constant 0 : index
    %6 = vector.load %arg4[%c0_5, %c0_6] : memref<32x4xf32, #tpu.memory_space<vmem>>, vector<32x4xf32>
    %cst_7 = arith.constant dense<0.000000e+00> : vector<32x4xf32>
    %7 = tpu.matmul %5, %6, %cst_7 {dimension_numbers = #tpu.dot_dimension_numbers<[1], [0], [0], [1], [0, 0, 1, 1], [], []>} : vector<32x32xf32>, vector<32x4xf32>, vector<32x4xf32> -> vector<32x4xf32>
    %8 = arith.mulf %5, %5 : vector<32x32xf32>
    %c0_8 = arith.constant 0 : index
    %c0_9 = arith.constant 0 : index
    %9 = vector.load %arg4[%c0_8, %c0_9] : memref<32x4xf32, #tpu.memory_space<vmem>>, vector<32x4xf32>
    %cst_10 = arith.constant dense<0.000000e+00> : vector<32x4xf32>
    %10 = tpu.matmul %8, %9, %cst_10 {dimension_numbers = #tpu.dot_dimension_numbers<[1], [0], [0], [1], [0, 0, 1, 1], [], []>} : vector<32x32xf32>, vector<32x4xf32>, vector<32x4xf32> -> vector<32x4xf32>
    %c0_11 = arith.constant 0 : index
    %c0_12 = arith.constant 0 : index
    %11 = vector.load %arg5[%c0_11, %c0_12] : memref<2x32xf32, #tpu.memory_space<vmem>>, vector<2x32xf32>
    %cst_13 = arith.constant dense<0.000000e+00> : vector<2x4xf32>
    %12 = tpu.matmul %11, %7, %cst_13 {dimension_numbers = #tpu.dot_dimension_numbers<[1], [0], [0], [1], [0, 0, 1, 1], [], []>} : vector<2x32xf32>, vector<32x4xf32>, vector<2x4xf32> -> vector<2x4xf32>
    %c0_14 = arith.constant 0 : index
    %c0_15 = arith.constant 0 : index
    %13 = vector.load %arg5[%c0_14, %c0_15] : memref<2x32xf32, #tpu.memory_space<vmem>>, vector<2x32xf32>
    %cst_16 = arith.constant dense<0.000000e+00> : vector<2x4xf32>
    %14 = tpu.matmul %13, %10, %cst_16 {dimension_numbers = #tpu.dot_dimension_numbers<[1], [0], [0], [1], [0, 0, 1, 1], [], []>} : vector<2x32xf32>, vector<32x4xf32>, vector<2x4xf32> -> vector<2x4xf32>
    %15 = arith.mulf %12, %12 : vector<2x4xf32>
    %16 = arith.subf %14, %15 : vector<2x4xf32>
    %cst_17 = arith.constant 1.00787401 : f32
    %17 = vector.broadcast %cst_17 : f32 to vector<2x4xf32>
    %18 = arith.mulf %16, %17 : vector<2x4xf32>
    %19 = arith.mulf %12, %12 : vector<2x4xf32>
    %20 = arith.addf %18, %19 : vector<2x4xf32>
    %cst_18 = arith.constant dense<0.000000e+00> : vector<2xf32>
    %21 = vector.multi_reduction <add>, %12, %cst_18 [1] : vector<2x4xf32> to vector<2xf32>
    %22 = vector.shape_cast %21 : vector<2xf32> to vector<2x1xf32>
    %cst_19 = arith.constant 4.000000e+00 : f32
    %23 = vector.broadcast %cst_19 : f32 to vector<2x1xf32>
    %24 = arith.divf %22, %23 : vector<2x1xf32>
    %cst_20 = arith.constant dense<0.000000e+00> : vector<2xf32>
    %25 = vector.multi_reduction <add>, %20, %cst_20 [1] : vector<2x4xf32> to vector<2xf32>
    %26 = vector.shape_cast %25 : vector<2xf32> to vector<2x1xf32>
    %cst_21 = arith.constant 4.000000e+00 : f32
    %27 = vector.broadcast %cst_21 : f32 to vector<2x1xf32>
    %28 = arith.divf %26, %27 : vector<2x1xf32>
    %29 = arith.mulf %24, %24 : vector<2x1xf32>
    %30 = arith.subf %28, %29 : vector<2x1xf32>
    %cst_22 = arith.constant dense<0.000000e+00> : vector<4xf32>
    %31 = vector.multi_reduction <add>, %12, %cst_22 [0] : vector<2x4xf32> to vector<4xf32>
    %32 = vector.shape_cast %31 : vector<4xf32> to vector<1x4xf32>
    %cst_23 = arith.constant 2.000000e+00 : f32
    %33 = vector.broadcast %cst_23 : f32 to vector<1x4xf32>
    %34 = arith.divf %32, %33 : vector<1x4xf32>
    %cst_24 = arith.constant dense<0.000000e+00> : vector<4xf32>
    %35 = vector.multi_reduction <add>, %20, %cst_24 [0] : vector<2x4xf32> to vector<4xf32>
    %36 = vector.shape_cast %35 : vector<4xf32> to vector<1x4xf32>
    %cst_25 = arith.constant 2.000000e+00 : f32
    %37 = vector.broadcast %cst_25 : f32 to vector<1x4xf32>
    %38 = arith.divf %36, %37 : vector<1x4xf32>
    %39 = arith.mulf %34, %34 : vector<1x4xf32>
    %40 = arith.subf %38, %39 : vector<1x4xf32>
    %c0_26 = arith.constant 0 : index
    %41 = memref.load %arg8[%c0_26] : memref<6xf32, #tpu.memory_space<smem>>
    %c1 = arith.constant 1 : index
    %42 = memref.load %arg8[%c1] : memref<6xf32, #tpu.memory_space<smem>>
    %c2 = arith.constant 2 : index
    %43 = memref.load %arg8[%c2] : memref<6xf32, #tpu.memory_space<smem>>
    %c3 = arith.constant 3 : index
    %44 = memref.load %arg8[%c3] : memref<6xf32, #tpu.memory_space<smem>>
    %c4 = arith.constant 4 : index
    %45 = memref.load %arg8[%c4] : memref<6xf32, #tpu.memory_space<smem>>
    %c5 = arith.constant 5 : index
    %46 = memref.load %arg8[%c5] : memref<6xf32, #tpu.memory_space<smem>>
    %47 = vector.broadcast %41 : f32 to vector<2x4xf32>
    %48 = arith.mulf %47, %12 : vector<2x4xf32>
    %49 = vector.broadcast %42 : f32 to vector<2x1xf32>
    %50 = arith.mulf %49, %24 : vector<2x1xf32>
    %51 = vector.broadcast %50 : vector<2x1xf32> to vector<2x4xf32>
    %52 = arith.addf %48, %51 : vector<2x4xf32>
    %53 = vector.broadcast %43 : f32 to vector<1x4xf32>
    %54 = arith.mulf %53, %34 : vector<1x4xf32>
    %55 = vector.broadcast %54 : vector<1x4xf32> to vector<2x4xf32>
    %56 = arith.addf %52, %55 : vector<2x4xf32>
    %57 = vector.broadcast %44 : f32 to vector<2x4xf32>
    %58 = arith.mulf %57, %18 : vector<2x4xf32>
    %59 = vector.broadcast %45 : f32 to vector<2x1xf32>
    %60 = arith.mulf %59, %30 : vector<2x1xf32>
    %61 = vector.broadcast %60 : vector<2x1xf32> to vector<2x4xf32>
    %62 = arith.addf %58, %61 : vector<2x4xf32>
    %63 = vector.broadcast %46 : f32 to vector<1x4xf32>
    %64 = arith.mulf %63, %40 : vector<1x4xf32>
    %65 = vector.broadcast %64 : vector<1x4xf32> to vector<2x4xf32>
    %66 = arith.addf %62, %65 : vector<2x4xf32>
    %cst_27 = arith.constant 9.99999974E-6 : f32
    %67 = vector.broadcast %cst_27 : f32 to vector<2x4xf32>
    %68 = arith.addf %66, %67 : vector<2x4xf32>
    %69 = math.rsqrt %68 : vector<2x4xf32>
    %c0_28 = arith.constant 0 : index
    %c0_29 = arith.constant 0 : index
    %70 = vector.load %arg6[%c0_28, %c0_29] : memref<32x2xf32, #tpu.memory_space<vmem>>, vector<32x2xf32>
    %c0_30 = arith.constant 0 : index
    %c0_31 = arith.constant 0 : index
    %71 = vector.load %arg7[%c0_30, %c0_31] : memref<4x32xf32, #tpu.memory_space<vmem>>, vector<4x32xf32>
    %cst_32 = arith.constant dense<0.000000e+00> : vector<2x32xf32>
    %72 = tpu.matmul %56, %71, %cst_32 {dimension_numbers = #tpu.dot_dimension_numbers<[1], [0], [0], [1], [0, 0, 1, 1], [], []>} : vector<2x4xf32>, vector<4x32xf32>, vector<2x32xf32> -> vector<2x32xf32>
    %cst_33 = arith.constant dense<0.000000e+00> : vector<32x32xf32>
    %73 = tpu.matmul %70, %72, %cst_33 {dimension_numbers = #tpu.dot_dimension_numbers<[1], [0], [0], [1], [0, 0, 1, 1], [], []>} : vector<32x2xf32>, vector<2x32xf32>, vector<32x32xf32> -> vector<32x32xf32>
    %c0_34 = arith.constant 0 : index
    %c0_35 = arith.constant 0 : index
    %74 = vector.load %arg6[%c0_34, %c0_35] : memref<32x2xf32, #tpu.memory_space<vmem>>, vector<32x2xf32>
    %c0_36 = arith.constant 0 : index
    %c0_37 = arith.constant 0 : index
    %75 = vector.load %arg7[%c0_36, %c0_37] : memref<4x32xf32, #tpu.memory_space<vmem>>, vector<4x32xf32>
    %cst_38 = arith.constant dense<0.000000e+00> : vector<2x32xf32>
    %76 = tpu.matmul %69, %75, %cst_38 {dimension_numbers = #tpu.dot_dimension_numbers<[1], [0], [0], [1], [0, 0, 1, 1], [], []>} : vector<2x4xf32>, vector<4x32xf32>, vector<2x32xf32> -> vector<2x32xf32>
    %cst_39 = arith.constant dense<0.000000e+00> : vector<32x32xf32>
    %77 = tpu.matmul %74, %76, %cst_39 {dimension_numbers = #tpu.dot_dimension_numbers<[1], [0], [0], [1], [0, 0, 1, 1], [], []>} : vector<32x2xf32>, vector<2x32xf32>, vector<32x32xf32> -> vector<32x32xf32>
    %78 = arith.subf %5, %73 : vector<32x32xf32>
    %79 = arith.mulf %78, %77 : vector<32x32xf32>
    %c1_40 = arith.constant 1 : index
    %c0_41 = arith.constant 0 : index
    %80 = vector.load %arg3[%c1_40, %c0_41] : memref<4x32xf32, #tpu.memory_space<vmem>>, vector<1x32xf32>
    %81 = vector.broadcast %80 : vector<1x32xf32> to vector<32x32xf32>
    %82 = arith.mulf %79, %81 : vector<32x32xf32>
    %c2_42 = arith.constant 2 : index
    %c0_43 = arith.constant 0 : index
    %83 = vector.load %arg3[%c2_42, %c0_43] : memref<4x32xf32, #tpu.memory_space<vmem>>, vector<1x32xf32>
    %84 = vector.broadcast %83 : vector<1x32xf32> to vector<32x32xf32>
    %85 = arith.addf %82, %84 : vector<32x32xf32>
    %cst_44 = arith.constant 0.000000e+00 : f32
    %86 = vector.broadcast %cst_44 : f32 to vector<32x32xf32>
    %87 = arith.cmpf oge, %85, %86 : vector<32x32xf32>
    %c3_45 = arith.constant 3 : index
    %c0_46 = arith.constant 0 : index
    %88 = vector.load %arg3[%c3_45, %c0_46] : memref<4x32xf32, #tpu.memory_space<vmem>>, vector<1x32xf32>
    %89 = vector.broadcast %88 : vector<1x32xf32> to vector<32x32xf32>
    %90 = arith.mulf %85, %89 : vector<32x32xf32>
    %91 = arith.select %87, %85, %90 : vector<32x32xi1>, vector<32x32xf32>
    %c0_47 = arith.constant 0 : index
    %c0_48 = arith.constant 0 : index
    %92 = vector.load %arg9[%c0_47, %c0_48] : memref<32x32xf32, #tpu.memory_space<vmem>>, vector<32x32xf32>
    tpu.vector_store %arg9[%c0_47, %c0_48], %91 {strides = array<i32>} : memref<32x32xf32, #tpu.memory_space<vmem>>, vector<32x32xf32>,
    return
  }
  func.func @transform_0(%arg0: i32) -> (i32, i32) {
    %c0_i32 = arith.constant 0 : i32
    %c0_i32_0 = arith.constant 0 : i32
    %c0_i32_1 = arith.constant 0 : i32
    return %c0_i32, %c0_i32_0 : i32, i32
  }
  func.func @transform_1(%arg0: i32) -> (i32, i32) {
    %c0_i32 = arith.constant 0 : i32
    %c0_i32_0 = arith.constant 0 : i32
    %c0_i32_1 = arith.constant 0 : i32
    return %c0_i32, %c0_i32_0 : i32, i32
  }
  func.func @transform_2(%arg0: i32) -> (i32, i32) {
    %c0_i32 = arith.constant 0 : i32
    %c0_i32_0 = arith.constant 0 : i32
    %c0_i32_1 = arith.constant 0 : i32
    return %c0_i32, %c0_i32_0 : i32, i32
  }
  func.func @transform_3(%arg0: i32) -> (i32, i32) {
    %c0_i32 = arith.constant 0 : i32
    %c0_i32_0 = arith.constant 0 : i32
    %c0_i32_1 = arith.constant 0 : i32
    return %c0_i32, %c0_i32_0 : i32, i32
  }
  func.func @transform_4(%arg0: i32) -> (i32, i32) {
    %c0_i32 = arith.constant 0 : i32
    %c0_i32_0 = arith.constant 0 : i32
    %c0_i32_1 = arith.constant 0 : i32
    return %c0_i32, %c0_i32_0 : i32, i32
  }
  func.func @transform_5(%arg0: i32) -> (i32, i32) {
    %c0_i32 = arith.constant 0 : i32
    %c0_i32_0 = arith.constant 0 : i32
    %c0_i32_1 = arith.constant 0 : i32
    return %c0_i32, %c0_i32_0 : i32, i32
  }
  func.func @transform_6(%arg0: i32) -> (i32, i32) {
    %c0_i32 = arith.constant 0 : i32
    %c0_i32_0 = arith.constant 0 : i32
    %c0_i32_1 = arith.constant 0 : i32
    return %c0_i32, %c0_i32_0 : i32, i32
  }
  func.func @transform_7(%arg0: i32) -> i32 {
    %c0_i32 = arith.constant 0 : i32
    %c0_i32_0 = arith.constant 0 : i32
    return %c0_i32 : i32
  }
  func.func @transform_8(%arg0: i32) -> (i32, i32) {
    %c0_i32 = arith.constant 0 : i32
    %c0_i32_0 = arith.constant 0 : i32
    %c0_i32_1 = arith.constant 0 : i32
    return %c0_i32, %c0_i32_0 : i32, i32
  }
}

</mosaic_0001>

<llo_original>
// kernel: tpu_custom_call.1
$region0: #{tpu_custom_call.1}
  #allocation0 [shape = 'u32[]', space=smem, size = 0x4, offset = 0x4, fixed_abs, tag = 'smem constant byte address 0x4 - core index']
  #allocation1 [shape = 'u32[72,128]{1,0:T(1,128)}', space=vmem, size = 0x9000, scoped, tag = 'internal scratch']
  %s0 = inlined_call_operand.vmem [shape: f32[32,64], index: 0, kind: input, shape index: {}]
  %s1 = inlined_call_operand.vmem [shape: f32[64,32], index: 1, kind: input, shape index: {}]
  %s2 = inlined_call_operand.vmem [shape: f32[4,32], index: 2, kind: input, shape index: {}]
  %s3 = inlined_call_operand.vmem [shape: f32[32,4], index: 3, kind: input, shape index: {}]
  %s4 = inlined_call_operand.vmem [shape: f32[2,32], index: 4, kind: input, shape index: {}]
  %s5 = inlined_call_operand.vmem [shape: f32[32,2], index: 5, kind: input, shape index: {}]
  %s6 = inlined_call_operand.vmem [shape: f32[4,32], index: 6, kind: input, shape index: {}]
  %s7 = inlined_call_operand.vmem [shape: f32[6], index: 7, kind: input, shape index: {}]
  %s8 = inlined_call_operand.hbm [shape: f32[32,32], index: 8, kind: output, shape index: {}]
  %s9 = sld [smem:[#allocation0]]
  $region46: #{tpu_custom_call.1} parent=0
    _
  %s11 = ssub.s32 1, %s9
  %s12 = scalar_select 0, %s11, %s9
  $region1: #{tpu_custom_call.1} parent=0
    #allocation2 [shape = 'u8[512]{0}', space=smem, size = 0x200, scoped, tag = 'input window, operand 7, single buffered']
    #allocation3 [shape = 's32[1]{0}', space=sflag, size = 0x4, scoped, tag = 'scoped memory for tpu_custom_call.1']
    #allocation4 [shape = 's32[1]{0}', space=sflag, size = 0x4, scoped, tag = 'scoped memory for tpu_custom_call.1']
    #allocation5 [shape = 'u8[16384]{0}', space=vmem, size = 0x4000, scoped, tag = 'output window, operand 0, single buffered']
    %13 = vsyncpa [#allocation4], 0
    %14 = vsyncpa [#allocation3], 0
    // Predicated region
    $region2: #{tpu_custom_call.1} parent=1 // pred_check
      _
    $region3: #{tpu_custom_call.1} parent=1 // pred_check_branch
      %16 = sbr.rel (0) target = $region5
    $region4: #{tpu_custom_call.1} parent=1 // pred_region
      _
    $region5: #{tpu_custom_call.1} parent=1 // pred_fallthru
      _
    // Predicated region
    $region6: #{tpu_custom_call.1} parent=1 // pred_check
      _
    $region7: #{tpu_custom_call.1} parent=1 // pred_check_branch
      %18 = sbr.rel (0) target = $region9
    $region8: #{tpu_custom_call.1} parent=1 // pred_region
      _
    $region9: #{tpu_custom_call.1} parent=1 // pred_fallthru
      _
    // Predicated region
    $region10: #{tpu_custom_call.1} parent=1 // pred_check
      _
    $region11: #{tpu_custom_call.1} parent=1 // pred_check_branch
      %20 = sbr.rel (0) target = $region13
    $region12: #{tpu_custom_call.1} parent=1 // pred_region
      _
    $region13: #{tpu_custom_call.1} parent=1 // pred_fallthru
      _
    // Predicated region
    $region14: #{tpu_custom_call.1} parent=1 // pred_check
      _
    $region15: #{tpu_custom_call.1} parent=1 // pred_check_branch
      %22 = sbr.rel (0) target = $region17
    $region16: #{tpu_custom_call.1} parent=1 // pred_region
      _
    $region17: #{tpu_custom_call.1} parent=1 // pred_fallthru
      _
    // Predicated region
    $region18: #{tpu_custom_call.1} parent=1 // pred_check
      _
    $region19: #{tpu_custom_call.1} parent=1 // pred_check_branch
      %24 = sbr.rel (0) target = $region21
    $region20: #{tpu_custom_call.1} parent=1 // pred_region
      _
    $region21: #{tpu_custom_call.1} parent=1 // pred_fallthru
      _
    // Predicated region
    $region22: #{tpu_custom_call.1} parent=1 // pred_check
      _
    $region23: #{tpu_custom_call.1} parent=1 // pred_check_branch
      %26 = sbr.rel (0) target = $region25
    $region24: #{tpu_custom_call.1} parent=1 // pred_region
      _
    $region25: #{tpu_custom_call.1} parent=1 // pred_fallthru
      _
    // Predicated region
    $region26: #{tpu_custom_call.1} parent=1 // pred_check
      _
    $region27: #{tpu_custom_call.1} parent=1 // pred_check_branch
      %28 = sbr.rel (0) target = $region29
    $region28: #{tpu_custom_call.1} parent=1 // pred_region
      _
    $region29: #{tpu_custom_call.1} parent=1 // pred_fallthru
      _
    // Predicated region
    $region30: #{tpu_custom_call.1} parent=1 // pred_check
      _
    $region31: #{tpu_custom_call.1} parent=1 // pred_check_branch
      %30 = sbr.rel (0) target = $region33
    $region32: #{tpu_custom_call.1} parent=1 // pred_region
      %32 = vsyncadd [#allocation4], 0
      %s34 = sshll.u32 %s7, 4
      %s35 = int_to_ptr.vmem [resolvable:$true] %s34
      %37 = dma.vmem_to_smem %s35, 16, [#allocation2], [#allocation4]
    $region33: #{tpu_custom_call.1} parent=1 // pred_fallthru
      _
    // Predicated region
    $region34: #{tpu_custom_call.1} parent=1 // pred_check
      _
    $region35: #{tpu_custom_call.1} parent=1 // pred_check_branch
      %39 = sbr.rel (0) target = $region37
    $region36: #{tpu_custom_call.1} parent=1 // pred_region
      %41 = dma.done [#allocation4], 16
    $region37: #{tpu_custom_call.1} parent=1 // pred_fallthru
      _
    %42 = sfence
    %v43 = vld [vmem:[%s0] sm:$0xff]
    %v44 = vld [vmem:[%s0 + $0x8] sm:$0xff]
    %v45 = vld [vmem:[%s0 + $0x10] sm:$0xff]
    %v46 = vld [vmem:[%s0 + $0x18] sm:$0xff]
    %v47 = vld [vmem:[%s1] sm:$0xff]
    %v48 = vld [vmem:[%s1 + $0x8] sm:$0xff]
    %v49 = vld [vmem:[%s1 + $0x10] sm:$0xff]
    %v50 = vld [vmem:[%s1 + $0x18] sm:$0xff]
    %v51 = vld [vmem:[%s1 + $0x20] sm:$0xff]
    %v52 = vld [vmem:[%s1 + $0x28] sm:$0xff]
    %v53 = vld [vmem:[%s1 + $0x30] sm:$0xff]
    %v54 = vld [vmem:[%s1 + $0x38] sm:$0xff]
    %v55 = vld [vmem:[%s2] sm:$0x1]
    %v56 = vperm.slane %v55, 0
    %vm57 = vcmask 523264
    %v59 = vsel %vm57, %v43, 0
    %v62 = vsel %vm57, %v44, 0
    %v65 = vsel %vm57, %v45, 0
    %v68 = vsel %vm57, %v46, 0
    %70 = vmatpush.msra.mxu0 0.0
    %71 = vmatpush.msra.mxu0 0.0
    %72 = vmatpush.msra.mxu0 0.0
    %73 = vmatpush.msra.mxu0 0.0
    %74 = vmatpush.msra.mxu0 0.0
    %75 = vmatpush.msra.mxu0 0.0
    %76 = vmatpush.msra.mxu0 0.0
    %77 = vmatpush.msra.mxu0 0.0
    %78 = vmatpush.msra.mxu0 %v54
    %79 = vmatpush.msra.mxu0 %v53
    %80 = vmatpush.msra.mxu0 %v52
    %81 = vmatpush.msra.mxu0 %v51
    %82 = vmatpush.msra.mxu0 %v50
    %83 = vmatpush.msra.mxu0 %v49
    %84 = vmatpush.msra.mxu0 %v48
    %85 = vmatpush.msra.mxu0 %v47
    %86 = vmatmul.f32.gmra.mxu0 %v59
    %v87 = vpop.f32.mrf.mxu0
    %v88 = vadd.f32 %v56, %v87
    %89 = vmatmul.f32.gmra.mxu0 %v62
    %v90 = vpop.f32.mrf.mxu0
    %v91 = vadd.f32 %v56, %v90
    %92 = vmatmul.f32.gmra.mxu0 %v65
    %v93 = vpop.f32.mrf.mxu0
    %v94 = vadd.f32 %v56, %v93
    %95 = vmatmul.f32.gmra.mxu0 %v68
    %v96 = vpop.f32.mrf.mxu0
    %v97 = vadd.f32 %v56, %v96
    %98 = vdwg.mxu0
    %v99 = vld [vmem:[%s3] sm:$0xff]
    %v100 = vld [vmem:[%s3 + $0x8] sm:$0xff]
    %v101 = vld [vmem:[%s3 + $0x10] sm:$0xff]
    %v102 = vld [vmem:[%s3 + $0x18] sm:$0xff]
    %vm103 = vcmask 261120
    %v105 = vsel %vm103, %v88, 0
    %v108 = vsel %vm103, %v91, 0
    %v111 = vsel %vm103, %v94, 0
    %v114 = vsel %vm103, %v97, 0
    %116 = vmatpush.msra.mxu0 0.0
    %117 = vmatpush.msra.mxu0 0.0
    %118 = vmatpush.msra.mxu0 0.0
    %119 = vmatpush.msra.mxu0 0.0
    %120 = vmatpush.msra.mxu0 0.0
    %121 = vmatpush.msra.mxu0 0.0
    %122 = vmatpush.msra.mxu0 0.0
    %123 = vmatpush.msra.mxu0 0.0
    %124 = vmatpush.msra.mxu0 0.0
    %125 = vmatpush.msra.mxu0 0.0
    %126 = vmatpush.msra.mxu0 0.0
    %127 = vmatpush.msra.mxu0 0.0
    %128 = vmatpush.msra.mxu0 %v102
    %129 = vmatpush.msra.mxu0 %v101
    %130 = vmatpush.msra.mxu0 %v100
    %131 = vmatpush.msra.mxu0 %v99
    %132 = vmatmul.f32.gmra.mxu0 %v105
    %v133 = vpop.f32.mrf.mxu0
    %v134 = vadd.f32 0.0, %v133
    %135 = vmatmul.f32.gmra.mxu0 %v108
    %v136 = vpop.f32.mrf.mxu0
    %v137 = vadd.f32 0.0, %v136
    %138 = vmatmul.f32.gmra.mxu0 %v111
    %v139 = vpop.f32.mrf.mxu0
    %v140 = vadd.f32 0.0, %v139
    %141 = vmatmul.f32.gmra.mxu0 %v114
    %v142 = vpop.f32.mrf.mxu0
    %v143 = vadd.f32 0.0, %v142
    %144 = vdwg.mxu0
    %v145 = vmul.f32 %v88, %v88
    %v146 = vmul.f32 %v91, %v91
    %v147 = vmul.f32 %v94, %v94
    %v148 = vmul.f32 %v97, %v97
    %v150 = vsel %vm103, %v145, 0
    %v153 = vsel %vm103, %v146, 0
    %v156 = vsel %vm103, %v147, 0
    %v159 = vsel %vm103, %v148, 0
    %161 = vmatpush.msra.mxu0 0.0
    %162 = vmatpush.msra.mxu0 0.0
    %163 = vmatpush.msra.mxu0 0.0
    %164 = vmatpush.msra.mxu0 0.0
    %165 = vmatpush.msra.mxu0 0.0
    %166 = vmatpush.msra.mxu0 0.0
    %167 = vmatpush.msra.mxu0 0.0
    %168 = vmatpush.msra.mxu0 0.0
    %169 = vmatpush.msra.mxu0 0.0
    %170 = vmatpush.msra.mxu0 0.0
    %171 = vmatpush.msra.mxu0 0.0
    %172 = vmatpush.msra.mxu0 0.0
    %173 = vmatpush.msra.mxu0 %v102
    %174 = vmatpush.msra.mxu0 %v101
    %175 = vmatpush.msra.mxu0 %v100
    %176 = vmatpush.msra.mxu0 %v99
    %177 = vmatmul.f32.gmra.mxu0 %v150
    %v178 = vpop.f32.mrf.mxu0
    %v179 = vadd.f32 0.0, %v178
    %180 = vmatmul.f32.gmra.mxu0 %v153
    %v181 = vpop.f32.mrf.mxu0
    %v182 = vadd.f32 0.0, %v181
    %183 = vmatmul.f32.gmra.mxu0 %v156
    %v184 = vpop.f32.mrf.mxu0
    %v185 = vadd.f32 0.0, %v184
    %186 = vmatmul.f32.gmra.mxu0 %v159
    %v187 = vpop.f32.mrf.mxu0
    %v188 = vadd.f32 0.0, %v187
    %189 = vdwg.mxu0
    %v190 = vld [vmem:[%s4] sm:$0x3]
    %v192 = vsel %vm103, %v190, 0
    %194 = vmatpush.msra.mxu0 0.0
    %195 = vmatpush.msra.mxu0 0.0
    %196 = vmatpush.msra.mxu0 0.0
    %197 = vmatpush.msra.mxu0 0.0
    %198 = vmatpush.msra.mxu0 0.0
    %199 = vmatpush.msra.mxu0 0.0
    %200 = vmatpush.msra.mxu0 0.0
    %201 = vmatpush.msra.mxu0 0.0
    %202 = vmatpush.msra.mxu0 0.0
    %203 = vmatpush.msra.mxu0 0.0
    %204 = vmatpush.msra.mxu0 0.0
    %205 = vmatpush.msra.mxu0 0.0
    %206 = vmatpush.msra.mxu0 %v143
    %207 = vmatpush.msra.mxu0 %v140
    %208 = vmatpush.msra.mxu0 %v137
    %209 = vmatpush.msra.mxu0 %v134
    %210 = vmatmul.f32.gmra.mxu0 %v192
    %v211 = vpop.f32.mrf.mxu0
    %v212 = vadd.f32 0.0, %v211
    %213 = vdwg.mxu0
    %214 = vmatpush.msra.mxu0 0.0
    %215 = vmatpush.msra.mxu0 0.0
    %216 = vmatpush.msra.mxu0 0.0
    %217 = vmatpush.msra.mxu0 0.0
    %218 = vmatpush.msra.mxu0 0.0
    %219 = vmatpush.msra.mxu0 0.0
    %220 = vmatpush.msra.mxu0 0.0
    %221 = vmatpush.msra.mxu0 0.0
    %222 = vmatpush.msra.mxu0 0.0
    %223 = vmatpush.msra.mxu0 0.0
    %224 = vmatpush.msra.mxu0 0.0
    %225 = vmatpush.msra.mxu0 0.0
    %226 = vmatpush.msra.mxu0 %v188
    %227 = vmatpush.msra.mxu0 %v185
    %228 = vmatpush.msra.mxu0 %v182
    %229 = vmatpush.msra.mxu0 %v179
    %230 = vmatmul.f32.gmra.mxu0 %v192
    %v231 = vpop.f32.mrf.mxu0
    %v232 = vadd.f32 0.0, %v231
    %233 = vdwg.mxu0
    %v234 = vmul.f32 %v212, %v212
    %v235 = vsub.f32 %v232, %v234
    %v236 = vmul.f32 %v235, 1.007874
    %v237 = vadd.f32 %v236, %v234
    %vm238 = vcmask 25600
    %v239 = vsel %vm238, %v212, 0.0
    %240 = vadd.xlane.f32.xlu0 %v239
    %v241 = vpop.xlane.xlu0 %240
    %v242 = vrcp.pop 4.0
    %v243 = vmul.f32 4.0, %v242
    %v244 = vsub.f32 1.0, %v243
    %v245 = vmul.f32 %v242, %v244
    %v246 = vadd.f32 %v242, %v245
    %vm247 = vweird.f32 %v242
    %v248 = vsel %vm247, %v242, %v246
    %v249 = vmul.f32 %v241, %v248
    %v250 = vsel %vm238, %v237, 0.0
    %251 = vadd.xlane.f32.xlu0 %v250
    %v252 = vpop.xlane.xlu0 %251
    %v253 = vmul.f32 %v252, %v248
    %v254 = vmul.f32 %v249, %v249
    %v255 = vsub.f32 %v253, %v254
    %v256 = vrot.slane %v239, 4
    %v257 = vadd.f32 %v239, %v256
    %v258 = vrot.slane %v257, 2
    %v259 = vadd.f32 %v257, %v258
    %v260 = vrot.slane %v259, 1
    %v261 = vadd.f32 %v259, %v260
    %v262 = vrcp.pop 2.0
    %v263 = vmul.f32 2.0, %v262
    %v264 = vsub.f32 1.0, %v263
    %v265 = vmul.f32 %v262, %v264
    %v266 = vadd.f32 %v262, %v265
    %vm267 = vweird.f32 %v262
    %v268 = vsel %vm267, %v262, %v266
    %v269 = vmul.f32 %v261, %v268
    %v270 = vrot.slane %v250, 4
    %v271 = vadd.f32 %v250, %v270
    %v272 = vrot.slane %v271, 2
    %v273 = vadd.f32 %v271, %v272
    %v274 = vrot.slane %v273, 1
    %v275 = vadd.f32 %v273, %v274
    %v276 = vmul.f32 %v275, %v268
    %v277 = vmul.f32 %v269, %v269
    %v278 = vsub.f32 %v276, %v277
    %s279 = sld [smem:[#allocation2]]
    %s280 = sld [smem:[#allocation2 + $0x1]]
    %s281 = sld [smem:[#allocation2 + $0x2]]
    %s282 = sld [smem:[#allocation2 + $0x3]]
    %s283 = sld [smem:[#allocation2 + $0x4]]
    %s284 = sld [smem:[#allocation2 + $0x5]]
    %v285 = vstv %s279
    %v286 = vmul.f32 %v285, %v212
    %v287 = vstv %s280
    %v288 = vmul.f32 %v287, %v249
    %v289 = vadd.f32 %v286, %v288
    %v290 = vstv %s281
    %v291 = vmul.f32 %v290, %v269
    %v292 = vadd.f32 %v289, %v291
    %v293 = vstv %s282
    %v294 = vmul.f32 %v293, %v236
    %v295 = vstv %s283
    %v296 = vmul.f32 %v295, %v255
    %v297 = vadd.f32 %v294, %v296
    %v298 = vstv %s284
    %v299 = vmul.f32 %v298, %v278
    %v300 = vadd.f32 %v297, %v299
    %v301 = vadd.f32 %v300, 1e-05
    %v302 = vrsqrt.pop %v301
    %v303 = vmul.f32 %v302, %v301
    %v304 = vmul.f32 %v303, %v302
    %v305 = vmul.f32 0.5, %v304
    %v306 = vsub.f32 1.5, %v305
    %v307 = vmul.f32 %v302, %v306
    %vm308 = vweird.f32 %v301
    %vm309 = vweird.f32 %v302
    %vm310 = vmor %vm308, %vm309
    %v311 = vsel %vm310, %v302, %v307
    %v312 = vld [vmem:[%s5] sm:$0xff]
    %v313 = vld [vmem:[%s5 + $0x8] sm:$0xff]
    %v314 = vld [vmem:[%s5 + $0x10] sm:$0xff]
    %v315 = vld [vmem:[%s5 + $0x18] sm:$0xff]
    %v316 = vld [vmem:[%s6] sm:$0xf]
    %vm317 = vcmask 31744
    %v319 = vsel %vm317, %v292, 0
    %vm321 = vcmask 1043456
    %v323 = vsel %vm321, %v316, 0
    %325 = vmatpush.msra.mxu0 0.0
    %326 = vmatpush.msra.mxu0 0.0
    %327 = vmatpush.msra.mxu0 0.0
    %328 = vmatpush.msra.mxu0 0.0
    %329 = vmatpush.msra.mxu0 0.0
    %330 = vmatpush.msra.mxu0 0.0
    %331 = vmatpush.msra.mxu0 0.0
    %332 = vmatpush.msra.mxu0 0.0
    %333 = vmatpush.msra.mxu0 0.0
    %334 = vmatpush.msra.mxu0 0.0
    %335 = vmatpush.msra.mxu0 0.0
    %336 = vmatpush.msra.mxu0 0.0
    %337 = vmatpush.msra.mxu0 0.0
    %338 = vmatpush.msra.mxu0 0.0
    %339 = vmatpush.msra.mxu0 0.0
    %340 = vmatpush.msra.mxu0 %v323
    %341 = vmatmul.f32.gmra.mxu0 %v319
    %v342 = vpop.f32.mrf.mxu0
    %v343 = vadd.f32 0.0, %v342
    %344 = vdwg.mxu0
    %vm345 = vcmask 15360
    %v347 = vsel %vm345, %v312, 0
    %v350 = vsel %vm345, %v313, 0
    %v353 = vsel %vm345, %v314, 0
    %v356 = vsel %vm345, %v315, 0
    %vm358 = vcmask 1041408
    %v360 = vsel %vm358, %v343, 0
    %362 = vmatpush.msra.mxu0 0.0
    %363 = vmatpush.msra.mxu0 0.0
    %364 = vmatpush.msra.mxu0 0.0
    %365 = vmatpush.msra.mxu0 0.0
    %366 = vmatpush.msra.mxu0 0.0
    %367 = vmatpush.msra.mxu0 0.0
    %368 = vmatpush.msra.mxu0 0.0
    %369 = vmatpush.msra.mxu0 0.0
    %370 = vmatpush.msra.mxu0 0.0
    %371 = vmatpush.msra.mxu0 0.0
    %372 = vmatpush.msra.mxu0 0.0
    %373 = vmatpush.msra.mxu0 0.0
    %374 = vmatpush.msra.mxu0 0.0
    %375 = vmatpush.msra.mxu0 0.0
    %376 = vmatpush.msra.mxu0 0.0
    %377 = vmatpush.msra.mxu0 %v360
    %378 = vmatmul.f32.gmra.mxu0 %v347
    %v379 = vpop.f32.mrf.mxu0
    %v380 = vadd.f32 0.0, %v379
    %381 = vmatmul.f32.gmra.mxu0 %v350
    %v382 = vpop.f32.mrf.mxu0
    %v383 = vadd.f32 0.0, %v382
    %384 = vmatmul.f32.gmra.mxu0 %v353
    %v385 = vpop.f32.mrf.mxu0
    %v386 = vadd.f32 0.0, %v385
    %387 = vmatmul.f32.gmra.mxu0 %v356
    %v388 = vpop.f32.mrf.mxu0
    %v389 = vadd.f32 0.0, %v388
    %390 = vdwg.mxu0
    %v392 = vsel %vm317, %v311, 0
    %394 = vmatpush.msra.mxu0 0.0
    %395 = vmatpush.msra.mxu0 0.0
    %396 = vmatpush.msra.mxu0 0.0
    %397 = vmatpush.msra.mxu0 0.0
    %398 = vmatpush.msra.mxu0 0.0
    %399 = vmatpush.msra.mxu0 0.0
    %400 = vmatpush.msra.mxu0 0.0
    %401 = vmatpush.msra.mxu0 0.0
    %402 = vmatpush.msra.mxu0 0.0
    %403 = vmatpush.msra.mxu0 0.0
    %404 = vmatpush.msra.mxu0 0.0
    %405 = vmatpush.msra.mxu0 0.0
    %406 = vmatpush.msra.mxu0 0.0
    %407 = vmatpush.msra.mxu0 0.0
    %408 = vmatpush.msra.mxu0 0.0
    %409 = vmatpush.msra.mxu0 %v323
    %410 = vmatmul.f32.gmra.mxu0 %v392
    %v411 = vpop.f32.mrf.mxu0
    %v412 = vadd.f32 0.0, %v411
    %413 = vdwg.mxu0
    %v415 = vsel %vm358, %v412, 0
    %417 = vmatpush.msra.mxu0 0.0
    %418 = vmatpush.msra.mxu0 0.0
    %419 = vmatpush.msra.mxu0 0.0
    %420 = vmatpush.msra.mxu0 0.0
    %421 = vmatpush.msra.mxu0 0.0
    %422 = vmatpush.msra.mxu0 0.0
    %423 = vmatpush.msra.mxu0 0.0
    %424 = vmatpush.msra.mxu0 0.0
    %425 = vmatpush.msra.mxu0 0.0
    %426 = vmatpush.msra.mxu0 0.0
    %427 = vmatpush.msra.mxu0 0.0
    %428 = vmatpush.msra.mxu0 0.0
    %429 = vmatpush.msra.mxu0 0.0
    %430 = vmatpush.msra.mxu0 0.0
    %431 = vmatpush.msra.mxu0 0.0
    %432 = vmatpush.msra.mxu0 %v415
    %433 = vmatmul.f32.gmra.mxu0 %v347
    %v434 = vpop.f32.mrf.mxu0
    %v435 = vadd.f32 0.0, %v434
    %436 = vmatmul.f32.gmra.mxu0 %v350
    %v437 = vpop.f32.mrf.mxu0
    %v438 = vadd.f32 0.0, %v437
    %439 = vmatmul.f32.gmra.mxu0 %v353
    %v440 = vpop.f32.mrf.mxu0
    %v441 = vadd.f32 0.0, %v440
    %442 = vmatmul.f32.gmra.mxu0 %v356
    %v443 = vpop.f32.mrf.mxu0
    %v444 = vadd.f32 0.0, %v443
    %445 = vdwg.mxu0
    %v446 = vsub.f32 %v88, %v380
    %v447 = vsub.f32 %v91, %v383
    %v448 = vsub.f32 %v94, %v386
    %v449 = vsub.f32 %v97, %v389
    %v450 = vmul.f32 %v446, %v435
    %v451 = vmul.f32 %v447, %v438
    %v452 = vmul.f32 %v448, %v441
    %v453 = vmul.f32 %v449, %v444
    %v454 = vld [vmem:[%s2 + $0x1] sm:$0x1]
    %v455 = vperm.slane %v454, 0
    %v456 = vmul.f32 %v450, %v455
    %v457 = vmul.f32 %v451, %v455
    %v458 = vmul.f32 %v452, %v455
    %v459 = vmul.f32 %v453, %v455
    %v460 = vld [vmem:[%s2 + $0x2] sm:$0x1]
    %v461 = vperm.slane %v460, 0
    %v462 = vadd.f32 %v456, %v461
    %v463 = vadd.f32 %v457, %v461
    %v464 = vadd.f32 %v458, %v461
    %v465 = vadd.f32 %v459, %v461
    %vm466 = vcmp.ge.f32.partialorder %v462, 0.0
    %vm467 = vcmp.ge.f32.partialorder %v463, 0.0
    %vm468 = vcmp.ge.f32.partialorder %v464, 0.0
    %vm469 = vcmp.ge.f32.partialorder %v465, 0.0
    %v470 = vld [vmem:[%s2 + $0x3] sm:$0x1]
    %v471 = vperm.slane %v470, 0
    %v472 = vmul.f32 %v462, %v471
    %v473 = vmul.f32 %v463, %v471
    %v474 = vmul.f32 %v464, %v471
    %v475 = vmul.f32 %v465, %v471
    %v476 = vsel %vm466, %v462, %v472
    %v477 = vsel %vm467, %v463, %v473
    %v478 = vsel %vm468, %v464, %v474
    %v479 = vsel %vm469, %v465, %v475
    %480 = vst.msk [vmem:[#allocation5] sm:$0xff] %vm103, %v476
    %481 = vst.msk [vmem:[#allocation5 + $0x8] sm:$0xff] %vm103, %v477
    %482 = vst.msk [vmem:[#allocation5 + $0x10] sm:$0xff] %vm103, %v478
    %483 = vst.msk [vmem:[#allocation5 + $0x18] sm:$0xff] %vm103, %v479
    // Predicated region
    $region38: #{tpu_custom_call.1} parent=1 // pred_check
      _
    $region39: #{tpu_custom_call.1} parent=1 // pred_check_branch
      %485 = sbr.rel (0) target = $region41
    $region40: #{tpu_custom_call.1} parent=1 // pred_region
      %487 = vsyncadd [#allocation3], 0
      %s488 = sshll.u32 [#allocation5], 4
      %s489 = int_to_ptr.vmem [resolvable:$true] %s488
      %s490 = sshll.u32 %s8, 4
      %s491 = int_to_ptr.hbm [resolvable:$true] %s490
      %496 = dma.vmem_to_hbm [thread:$0]  %s489, 512, %s491, [#allocation3], 128, 128, 8
    $region41: #{tpu_custom_call.1} parent=1 // pred_fallthru
      _
    // Predicated region
    $region42: #{tpu_custom_call.1} parent=1 // pred_check
      _
    $region43: #{tpu_custom_call.1} parent=1 // pred_check_branch
      %498 = sbr.rel (0) target = $region45
    $region44: #{tpu_custom_call.1} parent=1 // pred_region
      %500 = dma.done [#allocation3], 512
    $region45: #{tpu_custom_call.1} parent=1 // pred_fallthru
      _
    %501 = vsyncpa [#allocation3], 1
    %502 = vsyncpa [#allocation4], 1

</llo_original>
